<compile_context>
chip_gen: v6e
topology: v6e:2x2x1
jax: 0.10.0
libtpu: 0.0.40
codegen_flags: <defaults>
</compile_context>

<pallas_src>
import jax
import jax.numpy as jnp
from jax.experimental import pallas as pl
from jax.experimental.pallas import tpu as pltpu


def _make_normalize_kernel(r_block, num_row_blocks):
    """Per-tile kernel.  scale/shift are VMEM-resident for the whole grid
    (constant block index); each step slices its row block out of them."""

    def kernel(scale_ref, shift_ref, img_ref, out_ref):
        if num_row_blocks == 1:
            scale = scale_ref[...]
            shift = shift_ref[...]
        else:
            # When num_row_blocks > 1, r_block is a multiple of the sublane
            # tile, so this dynamic slice is aligned and in bounds (scale/shift
            # are padded to num_row_blocks * r_block rows in the wrapper).
            r0 = pl.multiple_of(pl.program_id(0) * r_block, r_block)
            scale = scale_ref[pl.ds(r0, r_block), :]
            shift = shift_ref[pl.ds(r0, r_block), :]
        # Fused (img - mean)/std == img * (1/std) + (-mean/std):
        # sublane-broadcast mul+add, ~2 VPU slots per vreg.  HBM-DMA bound.
        out_ref[...] = img_ref[...] * scale + shift

    return kernel


def _balance(total, block, unit):
    """Shrink `block` (a multiple of `unit`) so the ceil(total/block) blocks are
    near-equal sized -> less padded waste in the trailing block."""
    if block >= total:
        return total
    n = pl.cdiv(total, block)
    per = pl.cdiv(total, n)
    return max(unit, pl.cdiv(per, unit) * unit)


def _choose_tiles(rows, cols, itemsize):
    """Pick (R, Lb) row/lane block sizes: ~2 MiB per input tile, legal under the
    (8,128) tiling rule in every shape regime."""
    lane = 128
    # Sub-32-bit dtypes pack along sublanes: native sublane multiple scales up.
    sub = {4: 8, 2: 16, 1: 32}.get(itemsize, 8)
    target = 2 << 20  # ~2 MiB/tile: ~86% of HBM roofline (measured, v6e); the
                      # 4 double-buffered in+out tiles are ~8 MiB of VMEM.

    rows_aligned = rows >= sub and rows % sub == 0

    if rows_aligned and cols * itemsize * sub <= target:
        # Full-width tiles (each tile fully contiguous in HBM); block rows only.
        lb = cols
        r = (target // (cols * itemsize)) // sub * sub
        r = int(min(rows, max(sub, r)))
        r = _balance(rows, r, sub)
    elif rows_aligned:
        # Very wide rows (large H*W): tile the lane dim in 128-multiples too,
        # so even a minimal row block never produces a multi-10-MB tile.
        lb = (target // (sub * itemsize)) // lane * lane
        lb = int(min(cols, max(lane, lb)))
        lb = _balance(cols, lb, lane)
        r = (target // (lb * itemsize)) // sub * sub
        r = int(min(rows, max(sub, r)))
    else:
        # rows = N*C not sublane-aligned (e.g. N=1, C=3 RGB): use the full row
        # extent (block dim == array dim is legal) and create pipelining /
        # megacore parallelism along the lane dimension instead.
        r = rows
        lb = (target // max(rows * itemsize, 1)) // lane * lane
        lb = int(min(cols, max(lane, lb)))
        lb = _balance(cols, lb, lane)
    return r, lb


def normalization_forward(img, mean, std):
    """img: (N, C, H, W); mean/std: (C,).  Returns (img - mean) / std per channel."""
    N, C, H, W = img.shape
    rows, cols = N * C, H * W
    x = img.reshape(rows, cols)           # free reshape of contiguous NCHW
    itemsize = x.dtype.itemsize

    # Fused scale/shift, computed in f32 then cast to the image dtype.
    std32 = std.astype(jnp.float32)
    mean32 = mean.astype(jnp.float32)
    scale = (1.0 / std32).astype(img.dtype)
    shift = (-mean32 / std32).astype(img.dtype)

    R, Lb = _choose_tiles(rows, cols, itemsize)
    num_r = pl.cdiv(rows, R)
    num_c = pl.cdiv(cols, Lb)
    rows_pad = num_r * R

    # Per-row constants: row r = n*C + c -> channel c = r % C.  Padded to
    # rows_pad so the in-kernel dynamic row slice of the resident buffer is
    # always in bounds (padded rows only feed discarded output rows).
    scale_rows = jnp.tile(scale, N)
    shift_rows = jnp.tile(shift, N)
    if rows_pad != rows:
        scale_rows = jnp.pad(scale_rows, (0, rows_pad - rows))
        shift_rows = jnp.pad(shift_rows, (0, rows_pad - rows))
    scale_rows = scale_rows.reshape(rows_pad, 1)
    shift_rows = shift_rows.reshape(rows_pad, 1)

    kernel = _make_normalize_kernel(R, num_r)

    out = pl.pallas_call(
        kernel,
        out_shape=jax.ShapeDtypeStruct((rows, cols), img.dtype),
        grid=(num_r, num_c),
        in_specs=[
            # scale/shift: constant block index -> copied once, VMEM-resident.
            pl.BlockSpec((rows_pad, 1), lambda i, j: (0, 0)),
            pl.BlockSpec((rows_pad, 1), lambda i, j: (0, 0)),
            # img: (R, Lb) lane-dense tiles, ~2 MiB each.
            pl.BlockSpec((R, Lb), lambda i, j: (i, j)),
        ],
        out_specs=pl.BlockSpec((R, Lb), lambda i, j: (i, j)),
        # Both axes are independent -> megacore (v7x) can split either one.
        # Default scoped VMEM limit is plenty for the ~8 MiB working set.
        compiler_params=pltpu.CompilerParams(
            dimension_semantics=("parallel", "parallel"),
        ),
        # TODO(synk): callers that can donate `img` may pass
        # input_output_aliases={2: 0} here to halve the HBM footprint.
    )(scale_rows, shift_rows, x)

    return out.reshape(N, C, H, W)


if __name__ == "__main__":
    root = jax.random.PRNGKey(0)
    k1, k2 = jax.random.split(root)

    # Primary small shape (matches the module's NCHW image input).
    N, C, H, W = 2, 4, 16, 16
    img = jax.random.uniform(k1, (N, C, H, W), dtype=jnp.float32)
    mean = jnp.array([0.485, 0.456, 0.406, 0.5], dtype=jnp.float32)
    std = jnp.array([0.229, 0.224, 0.225, 0.25], dtype=jnp.float32)

    out = jax.block_until_ready(normalization_forward(img, mean, std))
    ref = (img - mean.reshape(1, C, 1, 1)) / std.reshape(1, C, 1, 1)
    assert out.shape == img.shape
    assert jnp.allclose(out, ref, atol=1e-5, rtol=1e-5)

    # Secondary shape exercising the rows % 8 != 0 path (classic N=1, C=3 RGB).
    N2, C2, H2, W2 = 1, 3, 16, 16
    img2 = jax.random.uniform(k2, (N2, C2, H2, W2), dtype=jnp.float32)
    mean2 = jnp.array([0.485, 0.456, 0.406], dtype=jnp.float32)
    std2 = jnp.array([0.229, 0.224, 0.225], dtype=jnp.float32)

    out2 = jax.block_until_ready(normalization_forward(img2, mean2, std2))
    ref2 = (img2 - mean2.reshape(1, C2, 1, 1)) / std2.reshape(1, C2, 1, 1)
    assert out2.shape == img2.shape
    assert jnp.allclose(out2, ref2, atol=1e-5, rtol=1e-5)

    print("KERNEL_OK")
</pallas_src>

<mosaic_0001>
module attributes {stable_mosaic.version = 11 : i64} {
  func.func @kernel(%arg0: i32, %arg1: i32, %arg2: memref<8x1xf32, #tpu.memory_space<vmem>>, %arg3: memref<8x1xf32, #tpu.memory_space<vmem>>, %arg4: memref<8x256xf32, #tpu.memory_space<vmem>>, %arg5: memref<8x256xf32, #tpu.memory_space<vmem>>) attributes {dimension_semantics = [#tpu.dimension_semantics<parallel>, #tpu.dimension_semantics<parallel>], iteration_bounds = array<i64: 1, 1>, scalar_prefetch = 0 : i64, scratch_operands = 0 : i64, tpu.core_type = #tpu.core_type<tc>, window_params = [{pipeline_mode = #tpu.pipeline_mode<synchronous>, transform_indices = @transform_0, window_bounds = array<i64: 8, 1>}, {pipeline_mode = #tpu.pipeline_mode<synchronous>, transform_indices = @transform_1, window_bounds = array<i64: 8, 1>}, {transform_indices = @transform_2, window_bounds = array<i64: 8, 256>}, {transform_indices = @transform_3, window_bounds = array<i64: 8, 256>}]} {
    %c0 = arith.constant 0 : index
    %c0_0 = arith.constant 0 : index
    %0 = vector.load %arg2[%c0, %c0_0] : memref<8x1xf32, #tpu.memory_space<vmem>>, vector<8x1xf32>
    %c0_1 = arith.constant 0 : index
    %c0_2 = arith.constant 0 : index
    %1 = vector.load %arg3[%c0_1, %c0_2] : memref<8x1xf32, #tpu.memory_space<vmem>>, vector<8x1xf32>
    %c0_3 = arith.constant 0 : index
    %c0_4 = arith.constant 0 : index
    %2 = vector.load %arg4[%c0_3, %c0_4] : memref<8x256xf32, #tpu.memory_space<vmem>>, vector<8x256xf32>
    %3 = vector.broadcast %0 : vector<8x1xf32> to vector<8x256xf32>
    %4 = arith.mulf %2, %3 : vector<8x256xf32>
    %5 = vector.broadcast %1 : vector<8x1xf32> to vector<8x256xf32>
    %6 = arith.addf %4, %5 : vector<8x256xf32>
    %c0_5 = arith.constant 0 : index
    %c0_6 = arith.constant 0 : index
    %7 = vector.load %arg5[%c0_5, %c0_6] : memref<8x256xf32, #tpu.memory_space<vmem>>, vector<8x256xf32>
    tpu.vector_store %arg5[%c0_5, %c0_6], %6 {strides = array<i32>} : memref<8x256xf32, #tpu.memory_space<vmem>>, vector<8x256xf32>,
    return
  }
  func.func @transform_0(%arg0: i32, %arg1: i32) -> (i32, i32) {
    %c0_i32 = arith.constant 0 : i32
    %c0_i32_0 = arith.constant 0 : i32
    %c0_i32_1 = arith.constant 0 : i32
    return %c0_i32, %c0_i32_0 : i32, i32
  }
  func.func @transform_1(%arg0: i32, %arg1: i32) -> (i32, i32) {
    %c0_i32 = arith.constant 0 : i32
    %c0_i32_0 = arith.constant 0 : i32
    %c0_i32_1 = arith.constant 0 : i32
    return %c0_i32, %c0_i32_0 : i32, i32
  }
  func.func @transform_2(%arg0: i32, %arg1: i32) -> (i32, i32) {
    %c0_i32 = arith.constant 0 : i32
    return %arg0, %arg1 : i32, i32
  }
  func.func @transform_3(%arg0: i32, %arg1: i32) -> (i32, i32) {
    %c0_i32 = arith.constant 0 : i32
    return %arg0, %arg1 : i32, i32
  }
}

</mosaic_0001>

<llo_original>
// kernel: tpu_custom_call.1
$region0: #{tpu_custom_call.1}
  #allocation0 [shape = 'u32[]', space=smem, size = 0x4, offset = 0x4, fixed_abs, tag = 'smem constant byte address 0x4 - core index']
  #allocation1 [shape = 'u32[144,128]{1,0:T(1,128)}', space=vmem, size = 0x12000, scoped, tag = 'internal scratch']
  %s0 = inlined_call_operand.vmem [shape: f32[8,1], index: 0, kind: input, shape index: {}]
  %s1 = inlined_call_operand.vmem [shape: f32[8,1], index: 1, kind: input, shape index: {}]
  %s2 = inlined_call_operand.vmem [shape: f32[8,256], index: 2, kind: input, shape index: {}]
  %s3 = inlined_call_operand.hbm [shape: f32[8,256], index: 3, kind: output, shape index: {}]
  %s4 = sld [smem:[#allocation0]]
  $region22: #{tpu_custom_call.1} parent=0
    _
  %s6 = ssub.s32 1, %s4
  %s7 = scalar_select 0, %s6, %s4
  $region1: #{tpu_custom_call.1} parent=0
    #allocation2 [shape = 'u8[8192]{0}', space=vmem, size = 0x2000, scoped, tag = 'output window, operand 0, single buffered']
    #allocation3 [shape = 's32[1]{0}', space=sflag, size = 0x4, scoped, tag = 'scoped memory for tpu_custom_call.1']
    %8 = vsyncpa [#allocation3], 0
    // Predicated region
    $region2: #{tpu_custom_call.1} parent=1 // pred_check
      _
    $region3: #{tpu_custom_call.1} parent=1 // pred_check_branch
      %10 = sbr.rel (0) target = $region5
    $region4: #{tpu_custom_call.1} parent=1 // pred_region
      _
    $region5: #{tpu_custom_call.1} parent=1 // pred_fallthru
      _
    // Predicated region
    $region6: #{tpu_custom_call.1} parent=1 // pred_check
      _
    $region7: #{tpu_custom_call.1} parent=1 // pred_check_branch
      %12 = sbr.rel (0) target = $region9
    $region8: #{tpu_custom_call.1} parent=1 // pred_region
      _
    $region9: #{tpu_custom_call.1} parent=1 // pred_fallthru
      _
    // Predicated region
    $region10: #{tpu_custom_call.1} parent=1 // pred_check
      _
    $region11: #{tpu_custom_call.1} parent=1 // pred_check_branch
      %14 = sbr.rel (0) target = $region13
    $region12: #{tpu_custom_call.1} parent=1 // pred_region
      _
    $region13: #{tpu_custom_call.1} parent=1 // pred_fallthru
      _
    %v15 = vld [vmem:[%s0] sm:$0xff]
    %v16 = vld [vmem:[%s1] sm:$0xff]
    %v17 = vld [vmem:[%s2] sm:$0xff]
    %v18 = vld [vmem:[%s2 + $0x8] sm:$0xff]
    %20 = vset.pattern.permute.xlu0 0
    %21 = vperm.xlu0 %20, %v15
    %v22 = vpop.permute.xlu0 %21
    %v24 = vmul.f32 %v17, %v22
    %v25 = vmul.f32 %v18, %v22
    %27 = vset.pattern.permute.xlu0 0
    %28 = vperm.xlu0 %27, %v16
    %v29 = vpop.permute.xlu0 %28
    %v31 = vadd.f32 %v24, %v29
    %v32 = vadd.f32 %v25, %v29
    %33 = vst [vmem:[#allocation2] sm:$0xff] %v31
    %34 = vst [vmem:[#allocation2 + $0x8] sm:$0xff] %v32
    // Predicated region
    $region14: #{tpu_custom_call.1} parent=1 // pred_check
      _
    $region15: #{tpu_custom_call.1} parent=1 // pred_check_branch
      %36 = sbr.rel (0) target = $region17
    $region16: #{tpu_custom_call.1} parent=1 // pred_region
      %s38 = ssub.s32 256, 256
      %39 = vsyncadd [#allocation3], %s38
      %s41 = sshll.u32 [#allocation2], 4
      %s42 = int_to_ptr.vmem [resolvable:$true] %s41
      %44 = dma.vmem_to_hbm [thread:$0]  %s42, 256, %s3, [#allocation3]
    $region17: #{tpu_custom_call.1} parent=1 // pred_fallthru
      _
    // Predicated region
    $region18: #{tpu_custom_call.1} parent=1 // pred_check
      _
    $region19: #{tpu_custom_call.1} parent=1 // pred_check_branch
      %46 = sbr.rel (0) target = $region21
    $region20: #{tpu_custom_call.1} parent=1 // pred_region
      %47 = dma.done [#allocation3], 256
    $region21: #{tpu_custom_call.1} parent=1 // pred_fallthru
      _
    %48 = vsyncpa [#allocation3], 1

</llo_original>
